<compile_context>
chip_gen: v5e
topology: v5e:2x2
jax: 0.10.0
libtpu: 0.0.40
codegen_flags: <defaults>
</compile_context>

<pallas_src>
import functools

import jax
import jax.numpy as jnp
from jax import lax
from jax.experimental import pallas as pl
from jax.experimental.pallas import tpu as pltpu


def _linear_softmax(x, w, b):
    # logits = x @ W^T + b ; contract over D directly so the PyTorch-layout weight
    # (C, D) is consumed as-is (no wrapper transpose / extra HBM read+write of W).
    logits = lax.dot_general(
        x, w,
        dimension_numbers=(((1,), (1,)), ((), ())),
        preferred_element_type=jnp.float32,
    ) + b
    # Numerically-stable softmax over classes; the divide goes to the EUP slot.
    m = jnp.max(logits, axis=-1, keepdims=True)
    e = jnp.exp(logits - m)
    denom = jnp.sum(e, axis=-1, keepdims=True)
    return e * pl.reciprocal(denom, approx=True)


def _forward_kernel(x_ref, w_ref, b_ref, probs_ref):
    probs = _linear_softmax(x_ref[...], w_ref[...], b_ref[...])
    # NOTE: num_classes (=5) < 128 -> masked partial store on the lane axis; cheap at
    # this size.  If C grows, keep the output last dim a multiple of 128 (lane-dense).
    probs_ref[...] = probs.astype(probs_ref.dtype)


def _forward_loss_kernel(x_ref, w_ref, b_ref, y_ref, loss_ref, *, total_rows):
    i = pl.program_id(0)

    @pl.when(i == 0)
    def _init():
        loss_ref[0, 0] = 0.0

    probs = _linear_softmax(x_ref[...], w_ref[...], b_ref[...])      # (TB, C) f32
    tb, c = probs.shape

    # INTENTIONAL QUIRK (matches the reference module): nn.CrossEntropyLoss is applied
    # to the *softmax probabilities*, so it log_softmaxes them again:
    #   loss_i = logsumexp_c(probs[i, :]) - probs[i, y_i]
    # probs are in (0, 1], so exp cannot overflow -> no max-subtraction needed here.
    lse = jnp.log(jnp.sum(jnp.exp(probs), axis=-1, keepdims=True))    # (TB, 1)
    col_ids = lax.broadcasted_iota(jnp.int32, (tb, c), 1)
    onehot = (col_ids == y_ref[...]).astype(jnp.float32)
    picked = jnp.sum(probs * onehot, axis=-1, keepdims=True)          # (TB, 1)

    # Mask rows of a padded (partial) last tile; use where so NaNs in dead rows
    # cannot propagate into the sum.
    row_ids = i * tb + lax.broadcasted_iota(jnp.int32, (tb, 1), 0)
    per_row = jnp.where(row_ids < total_rows, lse - picked, 0.0)

    loss_ref[0, 0] += jnp.sum(per_row)

    @pl.when(i == pl.num_programs(0) - 1)
    def _finalize():
        loss_ref[0, 0] = loss_ref[0, 0] / total_rows


def torch_model_forward(x, w, b, y=None, *, max_tile_b=512):
    """Pallas equivalent of TorchModel.forward.

    x: (B, D) f32, w: (C, D) f32 (PyTorch nn.Linear layout), b: (C,) f32,
    y: optional (B,) integer class ids.
    Returns softmax probabilities (B, C) when y is None, else the scalar loss.
    """
    B, D = x.shape
    C = w.shape[0]
    x = x.astype(jnp.float32)
    w = w.astype(jnp.float32)
    b2 = b.reshape(1, C).astype(jnp.float32)

    # One tile when the batch is small; otherwise 512-row tiles (multiple of 8 for the
    # sublane rule, large enough to amortize the ~0.35us/step overhead, small enough
    # that double-buffered x/probs tiles fit v7x's 64 MiB VMEM for typical D).
    tile_b = B if B <= max_tile_b else max_tile_b
    n_tiles = pl.cdiv(B, tile_b)

    x_spec = pl.BlockSpec((tile_b, D), lambda i: (i, 0))
    w_spec = pl.BlockSpec((C, D), lambda i: (0, 0))     # resident across the grid
    b_spec = pl.BlockSpec((1, C), lambda i: (0, 0))     # resident across the grid

    if y is None:
        return pl.pallas_call(
            _forward_kernel,
            out_shape=jax.ShapeDtypeStruct((B, C), jnp.float32),
            grid=(n_tiles,),
            in_specs=[x_spec, w_spec, b_spec],
            out_specs=pl.BlockSpec((tile_b, C), lambda i: (i, 0)),
            compiler_params=pltpu.CompilerParams(
                dimension_semantics=("parallel",)),
        )(x, w, b2)

    y2 = y.astype(jnp.int32).reshape(B, 1)
    y_spec = pl.BlockSpec((tile_b, 1), lambda i: (i, 0))
    loss = pl.pallas_call(
        functools.partial(_forward_loss_kernel, total_rows=B),
        out_shape=jax.ShapeDtypeStruct((1, 1), jnp.float32),
        grid=(n_tiles,),
        in_specs=[x_spec, w_spec, b_spec, y_spec],
        out_specs=pl.BlockSpec((1, 1), lambda i: (0, 0),
                               memory_space=pltpu.MemorySpace.SMEM),
        compiler_params=pltpu.CompilerParams(
            dimension_semantics=("arbitrary",)),   # grid reduction into loss_ref
    )(x, w, b2, y2)
    return loss[0, 0]


if __name__ == "__main__":
    batch, input_size, num_classes = 8, 32, 5

    key = jax.random.PRNGKey(0)
    kx, kw, kb, ky = jax.random.split(key, 4)

    x = jax.random.normal(kx, (batch, input_size), dtype=jnp.float32)
    bound = 1.0 / (input_size ** 0.5)
    w = jax.random.uniform(kw, (num_classes, input_size),
                           minval=-bound, maxval=bound, dtype=jnp.float32)
    b = jax.random.uniform(kb, (num_classes,),
                           minval=-bound, maxval=bound, dtype=jnp.float32)
    y = jax.random.randint(ky, (batch,), 0, num_classes, dtype=jnp.int32)

    # Inference path (y=None): softmax probabilities.
    probs = torch_model_forward(x, w, b)
    jax.block_until_ready(probs)

    # Training path (y given): scalar cross-entropy-of-probabilities loss.
    loss = torch_model_forward(x, w, b, y)
    jax.block_until_ready(loss)

    # Pure-JAX reference (loose tolerance: the kernel's softmax divide uses the
    # EUP approximate reciprocal).
    ref_logits = x @ w.T + b
    ref_probs = jax.nn.softmax(ref_logits, axis=1)
    ref_lse = jax.scipy.special.logsumexp(ref_probs, axis=1)
    ref_loss = jnp.mean(ref_lse - ref_probs[jnp.arange(batch), y])

    assert probs.shape == (batch, num_classes)
    assert loss.shape == ()
    assert bool(jnp.allclose(probs, ref_probs, atol=1e-2)), "probs mismatch"
    assert bool(jnp.allclose(loss, ref_loss, atol=1e-2)), "loss mismatch"

    print("KERNEL_OK")
</pallas_src>

<mosaic_0001>
module attributes {stable_mosaic.version = 11 : i64} {
  func.func @_forward_kernel(%arg0: i32, %arg1: memref<8x32xf32, #tpu.memory_space<vmem>>, %arg2: memref<5x32xf32, #tpu.memory_space<vmem>>, %arg3: memref<1x5xf32, #tpu.memory_space<vmem>>, %arg4: memref<8x5xf32, #tpu.memory_space<vmem>>) attributes {dimension_semantics = [#tpu.dimension_semantics<parallel>], iteration_bounds = array<i64: 1>, scalar_prefetch = 0 : i64, scratch_operands = 0 : i64, tpu.core_type = #tpu.core_type<tc>, window_params = [{transform_indices = @transform_0, window_bounds = array<i64: 8, 32>}, {pipeline_mode = #tpu.pipeline_mode<synchronous>, transform_indices = @transform_1, window_bounds = array<i64: 5, 32>}, {pipeline_mode = #tpu.pipeline_mode<synchronous>, transform_indices = @transform_2, window_bounds = array<i64: 1, 5>}, {transform_indices = @transform_3, window_bounds = array<i64: 8, 5>}]} {
    %c0 = arith.constant 0 : index
    %c0_0 = arith.constant 0 : index
    %0 = vector.load %arg1[%c0, %c0_0] : memref<8x32xf32, #tpu.memory_space<vmem>>, vector<8x32xf32>
    %c0_1 = arith.constant 0 : index
    %c0_2 = arith.constant 0 : index
    %1 = vector.load %arg2[%c0_1, %c0_2] : memref<5x32xf32, #tpu.memory_space<vmem>>, vector<5x32xf32>
    %c0_3 = arith.constant 0 : index
    %c0_4 = arith.constant 0 : index
    %2 = vector.load %arg3[%c0_3, %c0_4] : memref<1x5xf32, #tpu.memory_space<vmem>>, vector<1x5xf32>
    %cst = arith.constant dense<0.000000e+00> : vector<8x5xf32>
    %3 = tpu.matmul %0, %1, %cst {dimension_numbers = #tpu.dot_dimension_numbers<[1], [1], [0], [0], [0, 0, 1, 0], [], []>} : vector<8x32xf32>, vector<5x32xf32>, vector<8x5xf32> -> vector<8x5xf32>
    %4 = vector.broadcast %2 : vector<1x5xf32> to vector<8x5xf32>
    %5 = arith.addf %3, %4 : vector<8x5xf32>
    %cst_5 = arith.constant dense<0xFF800000> : vector<8xf32>
    %6 = vector.multi_reduction <maximumf>, %5, %cst_5 [1] : vector<8x5xf32> to vector<8xf32>
    %7 = vector.shape_cast %6 : vector<8xf32> to vector<8x1xf32>
    %8 = vector.broadcast %7 : vector<8x1xf32> to vector<8x5xf32>
    %9 = arith.subf %5, %8 : vector<8x5xf32>
    %10 = math.exp %9 : vector<8x5xf32>
    %cst_6 = arith.constant dense<0.000000e+00> : vector<8xf32>
    %11 = vector.multi_reduction <add>, %10, %cst_6 [1] : vector<8x5xf32> to vector<8xf32>
    %12 = vector.shape_cast %11 : vector<8xf32> to vector<8x1xf32>
    %13 = tpu.reciprocal %12 {approx = true} : vector<8x1xf32> -> vector<8x1xf32>
    %14 = vector.broadcast %13 : vector<8x1xf32> to vector<8x5xf32>
    %15 = arith.mulf %10, %14 : vector<8x5xf32>
    %c0_7 = arith.constant 0 : index
    %c0_8 = arith.constant 0 : index
    %16 = vector.load %arg4[%c0_7, %c0_8] : memref<8x5xf32, #tpu.memory_space<vmem>>, vector<8x5xf32>
    tpu.vector_store %arg4[%c0_7, %c0_8], %15 {strides = array<i32>} : memref<8x5xf32, #tpu.memory_space<vmem>>, vector<8x5xf32>,
    return
  }
  func.func @transform_0(%arg0: i32) -> (i32, i32) {
    %c0_i32 = arith.constant 0 : i32
    %c0_i32_0 = arith.constant 0 : i32
    return %arg0, %c0_i32 : i32, i32
  }
  func.func @transform_1(%arg0: i32) -> (i32, i32) {
    %c0_i32 = arith.constant 0 : i32
    %c0_i32_0 = arith.constant 0 : i32
    %c0_i32_1 = arith.constant 0 : i32
    return %c0_i32, %c0_i32_0 : i32, i32
  }
  func.func @transform_2(%arg0: i32) -> (i32, i32) {
    %c0_i32 = arith.constant 0 : i32
    %c0_i32_0 = arith.constant 0 : i32
    %c0_i32_1 = arith.constant 0 : i32
    return %c0_i32, %c0_i32_0 : i32, i32
  }
  func.func @transform_3(%arg0: i32) -> (i32, i32) {
    %c0_i32 = arith.constant 0 : i32
    %c0_i32_0 = arith.constant 0 : i32
    return %arg0, %c0_i32 : i32, i32
  }
}

</mosaic_0001>

<llo_original>
// kernel: tpu_custom_call.1
$region0: #{tpu_custom_call.1}
  #allocation0 [shape = 'u32[]', space=smem, size = 0x4, offset = 0x4, fixed_abs, tag = 'smem constant byte address 0x4 - core index']
  #allocation1 [shape = 'u32[72,128]{1,0:T(1,128)}', space=vmem, size = 0x9000, scoped, tag = 'internal scratch']
  %s0 = inlined_call_operand.hbm [shape: f32[8,32], index: 0, kind: input, shape index: {}]
  %s1 = inlined_call_operand.hbm [shape: f32[5,32], index: 1, kind: input, shape index: {}]
  %s2 = inlined_call_operand.vmem [shape: f32[1,5], index: 2, kind: input, shape index: {}]
  %s3 = inlined_call_operand.hbm [shape: f32[8,5], index: 3, kind: output, shape index: {}]
  %s4 = sld [smem:[#allocation0]]
  $region30: #{tpu_custom_call.1} parent=0
    _
  %s6 = ssub.s32 1, %s4
  %s7 = scalar_select 0, %s6, %s4
  $region1: #{tpu_custom_call.1} parent=0
    #allocation2 [shape = 'u8[4096]{0}', space=vmem, size = 0x1000, scoped, tag = 'input window, operand 0, single buffered']
    #allocation3 [shape = 's32[1]{0}', space=sflag, size = 0x4, scoped, tag = 'scoped memory for tpu_custom_call.1']
    #allocation4 [shape = 's32[1]{0}', space=sflag, size = 0x4, scoped, tag = 'scoped memory for tpu_custom_call.1']
    #allocation5 [shape = 'u8[4096]{0}', space=vmem, size = 0x1000, scoped, tag = 'input window, operand 1, single buffered']
    #allocation6 [shape = 's32[1]{0}', space=sflag, size = 0x4, scoped, tag = 'scoped memory for tpu_custom_call.1']
    #allocation7 [shape = 'u8[4096]{0}', space=vmem, size = 0x1000, scoped, tag = 'output window, operand 0, single buffered']
    %8 = vsyncpa [#allocation3], 0
    %9 = vsyncpa [#allocation6], 0
    %10 = vsyncpa [#allocation4], 0
    // Predicated region
    $region2: #{tpu_custom_call.1} parent=1 // pred_check
      _
    $region3: #{tpu_custom_call.1} parent=1 // pred_check_branch
      %12 = sbr.rel (0) target = $region5
    $region4: #{tpu_custom_call.1} parent=1 // pred_region
      %14 = vsyncadd [#allocation3], 0
      %s16 = sshll.u32 %s0, 4
      %s17 = int_to_ptr.hbm [resolvable:$true] %s16
      %s18 = sshll.u32 [#allocation2], 4
      %s19 = int_to_ptr.vmem [resolvable:$true] %s18
      %21 = dma.hbm_to_vmem [thread:$0]  %s17, 128, %s19, [#allocation3]
    $region5: #{tpu_custom_call.1} parent=1 // pred_fallthru
      _
    // Predicated region
    $region6: #{tpu_custom_call.1} parent=1 // pred_check
      _
    $region7: #{tpu_custom_call.1} parent=1 // pred_check_branch
      %23 = sbr.rel (0) target = $region9
    $region8: #{tpu_custom_call.1} parent=1 // pred_region
      %25 = vsyncadd [#allocation6], 0
      %s27 = sshll.u32 %s1, 4
      %s28 = int_to_ptr.hbm [resolvable:$true] %s27
      %s29 = sshll.u32 [#allocation5], 4
      %s30 = int_to_ptr.vmem [resolvable:$true] %s29
      %32 = dma.hbm_to_vmem [thread:$0]  %s28, 128, %s30, [#allocation6]
    $region9: #{tpu_custom_call.1} parent=1 // pred_fallthru
      _
    // Predicated region
    $region10: #{tpu_custom_call.1} parent=1 // pred_check
      _
    $region11: #{tpu_custom_call.1} parent=1 // pred_check_branch
      %34 = sbr.rel (0) target = $region13
    $region12: #{tpu_custom_call.1} parent=1 // pred_region
      _
    $region13: #{tpu_custom_call.1} parent=1 // pred_fallthru
      _
    // Predicated region
    $region14: #{tpu_custom_call.1} parent=1 // pred_check
      _
    $region15: #{tpu_custom_call.1} parent=1 // pred_check_branch
      %36 = sbr.rel (0) target = $region17
    $region16: #{tpu_custom_call.1} parent=1 // pred_region
      %38 = dma.done [#allocation3], 128
    $region17: #{tpu_custom_call.1} parent=1 // pred_fallthru
      _
    // Predicated region
    $region18: #{tpu_custom_call.1} parent=1 // pred_check
      _
    $region19: #{tpu_custom_call.1} parent=1 // pred_check_branch
      %40 = sbr.rel (0) target = $region21
    $region20: #{tpu_custom_call.1} parent=1 // pred_region
      %42 = dma.done [#allocation6], 128
    $region21: #{tpu_custom_call.1} parent=1 // pred_fallthru
      _
    %v43 = vld [vmem:[#allocation2] sm:$0xff]
    %v44 = vld [vmem:[#allocation5] sm:$0x1f]
    %v45 = vld [vmem:[%s2] sm:$0x1]
    %v47 = vperm.slane %v45, 0
    %vm49 = vcmask 261120
    %v51 = vsel %vm49, %v43, 0
    %v54 = vsel %vm49, %v44, 0
    %56 = vmatpush.xpose.msra.mxu0 0.0
    %57 = vmatpush.xpose.msra.mxu0 0.0
    %58 = vmatpush.xpose.msra.mxu0 0.0
    %59 = vmatpush.xpose.msra.mxu0 0.0
    %60 = vmatpush.xpose.msra.mxu0 0.0
    %61 = vmatpush.xpose.msra.mxu0 0.0
    %62 = vmatpush.xpose.msra.mxu0 0.0
    %63 = vmatpush.xpose.msra.mxu0 0.0
    %64 = vmatpush.xpose.msra.mxu0 0.0
    %65 = vmatpush.xpose.msra.mxu0 0.0
    %66 = vmatpush.xpose.msra.mxu0 0.0
    %67 = vmatpush.xpose.msra.mxu0 0.0
    %68 = vmatpush.xpose.msra.mxu0 0.0
    %69 = vmatpush.xpose.msra.mxu0 0.0
    %70 = vmatpush.xpose.msra.mxu0 0.0
    %71 = vmatpush.xpose.msra.mxu0 %v54
    %72 = vmatmul.f32.gmra.mxu0 %v51
    %v73 = vpop.f32.mrf.mxu0
    %v74 = vadd.f32 %v47, %v73
    %75 = vdwg.mxu0
    %vm76 = vcmask 39936
    %v77 = vsel %vm76, %v74, -inf
    %78 = vmax.xlane.f32.xlu0 %v77
    %v79 = vpop.xlane.xlu0 %78
    %v80 = vsub.f32 %v74, %v79
    %v81 = vmul.f32 %v80, 1.442695
    %v82 = vpow.pop %v81
    %v83 = vsel %vm76, %v82, 0.0
    %84 = vadd.xlane.f32.xlu0 %v83
    %v85 = vpop.xlane.xlu0 %84
    %v86 = vrcp.pop %v85
    %v87 = vmul.f32 %v82, %v86
    %88 = vst.msk [vmem:[#allocation7] sm:$0xff] %vm76, %v87
    // Predicated region
    $region22: #{tpu_custom_call.1} parent=1 // pred_check
      _
    $region23: #{tpu_custom_call.1} parent=1 // pred_check_branch
      %90 = sbr.rel (0) target = $region25
    $region24: #{tpu_custom_call.1} parent=1 // pred_region
      %92 = vsyncadd [#allocation4], 0
      %s94 = sshll.u32 [#allocation7], 4
      %s95 = int_to_ptr.vmem [resolvable:$true] %s94
      %s96 = sshll.u32 %s3, 4
      %s97 = int_to_ptr.hbm [resolvable:$true] %s96
      %99 = dma.vmem_to_hbm [thread:$0]  %s95, 128, %s97, [#allocation4]
    $region25: #{tpu_custom_call.1} parent=1 // pred_fallthru
      _
    // Predicated region
    $region26: #{tpu_custom_call.1} parent=1 // pred_check
      _
    $region27: #{tpu_custom_call.1} parent=1 // pred_check_branch
      %101 = sbr.rel (0) target = $region29
    $region28: #{tpu_custom_call.1} parent=1 // pred_region
      %103 = dma.done [#allocation4], 128
    $region29: #{tpu_custom_call.1} parent=1 // pred_fallthru
      _
    %104 = vsyncpa [#allocation3], 1
    %105 = vsyncpa [#allocation6], 1
    %106 = vsyncpa [#allocation4], 1

</llo_original>
